<compile_context>
chip_gen: v6e
topology: v6e:2x2x1
jax: 0.10.0
libtpu: 0.0.40
codegen_flags: <defaults>
</compile_context>

<pallas_src>
import functools

import jax
import jax.numpy as jnp
from jax.experimental import pallas as pl
from jax.experimental.pallas import tpu as pltpu

_EPS = 1e-5


def _film_kernel(x_ref, gb_ref, o_ref, *, inv_n, t_valid):
    # x_ref / o_ref: (B, tC, Tp)    gb_ref: (B, tC, 2) f32  (g, beta on last dim)
    gb = gb_ref[...]
    g = gb[:, :, 0:1]           # (B, tC, 1)
    beta = gb[:, :, 1:2]        # (B, tC, 1)

    tp = x_ref.shape[2]

    # --- pass 1: per-channel mean (padded lanes are zero -> sum unaffected) ---
    s = jnp.sum(x_ref[...].astype(jnp.float32), axis=(0, 2), keepdims=True)
    mean = s * inv_n                                        # (1, tC, 1)

    # --- pass 2: centered (two-pass) biased variance, masked on padded lanes ---
    d = x_ref[...].astype(jnp.float32) - mean
    if t_valid != tp:
        lane = jax.lax.broadcasted_iota(jnp.int32, (1, 1, tp), 2)
        d = jnp.where(lane < t_valid, d, 0.0)
    var = jnp.sum(d * d, axis=(0, 2), keepdims=True) * inv_n
    inv_std = jax.lax.rsqrt(var + _EPS)                     # (1, tC, 1)

    # --- fused BN + FiLM affine: out = x * scale + shift ---
    # Re-read x from VMEM instead of holding the full f32 tile live across
    # passes (avoids vreg spills at large tC; VMEM loads are cheap).
    scale = g * inv_std                                     # (B, tC, 1)
    shift = beta - mean * scale                             # (B, tC, 1)
    o_ref[...] = (x_ref[...].astype(jnp.float32) * scale + shift).astype(o_ref.dtype)


def _vmem_capacity_bytes():
    try:
        info = pltpu.get_tpu_info()
        cap = getattr(info, "vmem_capacity_bytes", None)
        if cap:
            return int(cap)
    except Exception:
        pass
    return 64 << 20  # conservative fallback (v7x per-TC VMEM)


def _choose_tile_c(B, C, Tp, itemsize, vmem_budget_bytes):
    """Largest multiple-of-8 divisor of C whose working set fits the budget:
    2x double-buffered x-in + 2x out blocks plus in-kernel f32 temporaries,
    capped so the grid keeps >= 2-4 steps (pipelining / v7x megacore)."""
    if C % 8 != 0:
        return C  # full-C block: satisfies the "equals full dim" layout rule
    per_ch = 4 * B * Tp * itemsize + 2 * B * Tp * 4  # buffers + f32 temporaries
    tc = (vmem_budget_bytes // max(per_ch, 1)) // 8 * 8
    tc = max(8, min(C, tc))
    # Grid-step floor: keep at least ~4 steps (2 for small C) so
    # double-buffering overlaps and the parallel axis can split across TCs.
    target_steps = 4 if C >= 32 else (2 if C >= 16 else 1)
    tc = min(tc, max(8, (C // target_steps) // 8 * 8))
    while C % tc != 0:
        tc -= 8
    # TODO(synk): if even tC=8 exceeds the budget (huge B*T), switch to a
    # T-tiled two-pass fallback (stats in VMEM scratch, "arbitrary" T axis)
    # instead of oversubscribing VMEM; for now we raise vmem_limit_bytes.
    return max(tc, 8)


def film(x, cond, w_t, bias, *, tile_c=None):
    """FiLM forward.

    x:    (B, C, T) channels-first, like PyTorch NCL.
    cond: (B, 1, D) or (B, D).
    w_t:  (D, 2C)   (transposed PyTorch Linear weight).
    bias: (2C,).
    """
    B, C, T = x.shape
    cond2 = cond.reshape(B, -1).astype(jnp.float32)

    # Tiny conditioning projection in plain XLA (hoisted out of the kernel).
    proj = cond2 @ w_t.astype(jnp.float32) + bias.astype(jnp.float32)   # (B, 2C)
    # Pack g/beta into one f32 array -> one small DMA per grid step.
    gb = jnp.stack([proj[:, :C], proj[:, C:]], axis=-1)                 # (B, C, 2)

    # Lane-dense stores: pad T up to a multiple of 128 (stats use the true
    # element count; padded tail is sliced off afterwards).
    Tp = -(-T // 128) * 128
    x_in = x if Tp == T else jnp.pad(x, ((0, 0), (0, 0), (0, Tp - T)))

    itemsize = jnp.dtype(x.dtype).itemsize
    cap = _vmem_capacity_bytes()
    budget = min(3 * cap // 8, 48 << 20)     # ~48 MiB on 128 MiB chips, ~24 MiB on v7x
    if tile_c is None:
        tile_c = _choose_tile_c(B, C, Tp, itemsize, budget)
    assert C % tile_c == 0, (C, tile_c)

    # Explicit scoped-VMEM limit sized to the chosen tile (with headroom),
    # capped well below physical capacity.
    tile_bytes = tile_c * (4 * B * Tp * itemsize + 2 * B * Tp * 4) + 4 * B * tile_c * 2 * 4
    vmem_limit = int(min(max(tile_bytes * 3 // 2, 32 << 20), cap * 3 // 4))

    kernel = functools.partial(_film_kernel, inv_n=1.0 / float(B * T), t_valid=T)

    cost = pl.CostEstimate(
        flops=6 * B * C * T,
        transcendentals=C,
        bytes_accessed=2 * B * C * T * itemsize + B * C * 2 * 4,
    )

    out = pl.pallas_call(
        kernel,
        out_shape=jax.ShapeDtypeStruct((B, C, Tp), x.dtype),
        grid=(C // tile_c,),
        in_specs=[
            pl.BlockSpec((B, tile_c, Tp), lambda i: (0, i, 0)),
            pl.BlockSpec((B, tile_c, 2), lambda i: (0, i, 0)),
        ],
        out_specs=pl.BlockSpec((B, tile_c, Tp), lambda i: (0, i, 0)),
        compiler_params=pltpu.CompilerParams(
            dimension_semantics=("parallel",),
            vmem_limit_bytes=vmem_limit,
        ),
        cost_estimate=cost,
    )(x_in, gb)

    return out if Tp == T else out[:, :, :T]


def film_reference(x, cond, w_t, bias):
    """Pure-JAX reference mirroring the PyTorch forward (training-mode BN)."""
    B, C, T = x.shape
    proj = cond.reshape(B, -1) @ w_t + bias                 # (B, 2C)
    g = proj[:, :C][:, :, None]                             # (B, C, 1)
    beta = proj[:, C:][:, :, None]                          # (B, C, 1)
    mean = jnp.mean(x, axis=(0, 2), keepdims=True)
    var = jnp.mean((x - mean) ** 2, axis=(0, 2), keepdims=True)
    xn = (x - mean) / jnp.sqrt(var + _EPS)
    return xn * g + beta


if __name__ == "__main__":
    key = jax.random.PRNGKey(0)
    kx, kc, kw, kb = jax.random.split(key, 4)

    # Small but layout-friendly shapes: C multiple of 8 (sublane), T multiple
    # of 128 (lane-dense stores), still a tiny problem.
    B, C, T, D = 2, 16, 256, 8

    x = jax.random.normal(kx, (B, C, T), dtype=jnp.float32)
    cond = jax.random.normal(kc, (B, 1, D), dtype=jnp.float32)

    # Deterministic "Linear(cond_dim, 2C)" params; PyTorch stores weight as
    # (2C, D), we generate the transposed (D, 2C) directly.
    bound = 1.0 / jnp.sqrt(D)
    w_t = jax.random.uniform(kw, (D, 2 * C), jnp.float32, -bound, bound)
    bias = jax.random.uniform(kb, (2 * C,), jnp.float32, -bound, bound)

    # 1) tile_c=8 -> grid=(2,), exercising the pipelined multi-step path.
    out = jax.block_until_ready(film(x, cond, w_t, bias, tile_c=8))
    ref = film_reference(x, cond, w_t, bias)
    assert out.shape == (B, C, T)
    assert jnp.allclose(out, ref, atol=1e-5, rtol=1e-5), "mismatch vs reference (T=256)"

    # 2) Non-128-multiple T exercises the pad + masked-variance path
    #    (auto tile_c, auto VMEM budget).
    T2 = 200
    x2 = jax.random.normal(kx, (B, C, T2), dtype=jnp.float32)
    out2 = jax.block_until_ready(film(x2, cond, w_t, bias))
    ref2 = film_reference(x2, cond, w_t, bias)
    assert out2.shape == (B, C, T2)
    assert jnp.allclose(out2, ref2, atol=1e-5, rtol=1e-5), "mismatch vs reference (T=200)"

    print("KERNEL_OK")
</pallas_src>

<mosaic_0001>
module attributes {stable_mosaic.version = 11 : i64} {
  func.func @_film_kernel(%arg0: i32, %arg1: memref<2x8x256xf32, #tpu.memory_space<vmem>>, %arg2: memref<2x8x2xf32, #tpu.memory_space<vmem>>, %arg3: memref<2x8x256xf32, #tpu.memory_space<vmem>>) attributes {dimension_semantics = [#tpu.dimension_semantics<parallel>], iteration_bounds = array<i64: 2>, scalar_prefetch = 0 : i64, scratch_operands = 0 : i64, tpu.core_type = #tpu.core_type<tc>, window_params = [{transform_indices = @transform_0, window_bounds = array<i64: 2, 8, 256>}, {transform_indices = @transform_1, window_bounds = array<i64: 2, 8, 2>}, {transform_indices = @transform_2, window_bounds = array<i64: 2, 8, 256>}]} {
    %c0 = arith.constant 0 : index
    %c0_0 = arith.constant 0 : index
    %c0_1 = arith.constant 0 : index
    %0 = vector.load %arg2[%c0, %c0_0, %c0_1] : memref<2x8x2xf32, #tpu.memory_space<vmem>>, vector<2x8x2xf32>
    %1 = vector.extract_strided_slice %0 {offsets = [0, 0, 0], sizes = [2, 8, 1], strides = [1, 1, 1]} : vector<2x8x2xf32> to vector<2x8x1xf32>
    %2 = vector.extract_strided_slice %0 {offsets = [0, 0, 1], sizes = [2, 8, 1], strides = [1, 1, 1]} : vector<2x8x2xf32> to vector<2x8x1xf32>
    %c0_2 = arith.constant 0 : index
    %c0_3 = arith.constant 0 : index
    %c0_4 = arith.constant 0 : index
    %3 = vector.load %arg1[%c0_2, %c0_3, %c0_4] : memref<2x8x256xf32, #tpu.memory_space<vmem>>, vector<2x8x256xf32>
    %cst = arith.constant dense<0.000000e+00> : vector<8xf32>
    %4 = vector.multi_reduction <add>, %3, %cst [0, 2] : vector<2x8x256xf32> to vector<8xf32>
    %5 = vector.shape_cast %4 : vector<8xf32> to vector<1x8x1xf32>
    %cst_5 = arith.constant 0.001953125 : f32
    %6 = vector.broadcast %cst_5 : f32 to vector<1x8x1xf32>
    %7 = arith.mulf %5, %6 : vector<1x8x1xf32>
    %c0_6 = arith.constant 0 : index
    %c0_7 = arith.constant 0 : index
    %c0_8 = arith.constant 0 : index
    %8 = vector.load %arg1[%c0_6, %c0_7, %c0_8] : memref<2x8x256xf32, #tpu.memory_space<vmem>>, vector<2x8x256xf32>
    %9 = vector.broadcast %7 : vector<1x8x1xf32> to vector<2x8x256xf32>
    %10 = arith.subf %8, %9 : vector<2x8x256xf32>
    %11 = arith.mulf %10, %10 : vector<2x8x256xf32>
    %cst_9 = arith.constant dense<0.000000e+00> : vector<8xf32>
    %12 = vector.multi_reduction <add>, %11, %cst_9 [0, 2] : vector<2x8x256xf32> to vector<8xf32>
    %13 = vector.shape_cast %12 : vector<8xf32> to vector<1x8x1xf32>
    %cst_10 = arith.constant 0.001953125 : f32
    %14 = vector.broadcast %cst_10 : f32 to vector<1x8x1xf32>
    %15 = arith.mulf %13, %14 : vector<1x8x1xf32>
    %cst_11 = arith.constant 9.99999974E-6 : f32
    %16 = vector.broadcast %cst_11 : f32 to vector<1x8x1xf32>
    %17 = arith.addf %15, %16 : vector<1x8x1xf32>
    %18 = math.rsqrt %17 : vector<1x8x1xf32>
    %19 = vector.broadcast %18 : vector<1x8x1xf32> to vector<2x8x1xf32>
    %20 = arith.mulf %1, %19 : vector<2x8x1xf32>
    %21 = vector.broadcast %7 : vector<1x8x1xf32> to vector<2x8x1xf32>
    %22 = arith.mulf %21, %20 : vector<2x8x1xf32>
    %23 = arith.subf %2, %22 : vector<2x8x1xf32>
    %c0_12 = arith.constant 0 : index
    %c0_13 = arith.constant 0 : index
    %c0_14 = arith.constant 0 : index
    %24 = vector.load %arg1[%c0_12, %c0_13, %c0_14] : memref<2x8x256xf32, #tpu.memory_space<vmem>>, vector<2x8x256xf32>
    %25 = vector.broadcast %20 : vector<2x8x1xf32> to vector<2x8x256xf32>
    %26 = arith.mulf %24, %25 : vector<2x8x256xf32>
    %27 = vector.broadcast %23 : vector<2x8x1xf32> to vector<2x8x256xf32>
    %28 = arith.addf %26, %27 : vector<2x8x256xf32>
    %c0_15 = arith.constant 0 : index
    %c0_16 = arith.constant 0 : index
    %c0_17 = arith.constant 0 : index
    %29 = vector.load %arg3[%c0_15, %c0_16, %c0_17] : memref<2x8x256xf32, #tpu.memory_space<vmem>>, vector<2x8x256xf32>
    tpu.vector_store %arg3[%c0_15, %c0_16, %c0_17], %28 {strides = array<i32>} : memref<2x8x256xf32, #tpu.memory_space<vmem>>, vector<2x8x256xf32>,
    return
  }
  func.func @transform_0(%arg0: i32) -> (i32, i32, i32) {
    %c0_i32 = arith.constant 0 : i32
    %c0_i32_0 = arith.constant 0 : i32
    %c0_i32_1 = arith.constant 0 : i32
    return %c0_i32, %arg0, %c0_i32_0 : i32, i32, i32
  }
  func.func @transform_1(%arg0: i32) -> (i32, i32, i32) {
    %c0_i32 = arith.constant 0 : i32
    %c0_i32_0 = arith.constant 0 : i32
    %c0_i32_1 = arith.constant 0 : i32
    return %c0_i32, %arg0, %c0_i32_0 : i32, i32, i32
  }
  func.func @transform_2(%arg0: i32) -> (i32, i32, i32) {
    %c0_i32 = arith.constant 0 : i32
    %c0_i32_0 = arith.constant 0 : i32
    %c0_i32_1 = arith.constant 0 : i32
    return %c0_i32, %arg0, %c0_i32_0 : i32, i32, i32
  }
}

</mosaic_0001>

<llo_original>
// kernel: tpu_custom_call.1
$region0: #{tpu_custom_call.1}
  #allocation0 [shape = 'u32[]', space=smem, size = 0x4, offset = 0x4, fixed_abs, tag = 'smem constant byte address 0x4 - core index']
  #allocation1 [shape = 'u32[144,128]{1,0:T(1,128)}', space=vmem, size = 0x12000, scoped, tag = 'internal scratch']
  %s0 = inlined_call_operand.hbm [shape: f32[2,16,256], index: 0, kind: input, shape index: {}]
  %s1 = inlined_call_operand.vmem [shape: f32[2,16,2], index: 1, kind: input, shape index: {}]
  %s2 = inlined_call_operand.hbm [shape: f32[2,16,256], index: 2, kind: output, shape index: {}]
  %s3 = sld [smem:[#allocation0]]
  $region83: #{tpu_custom_call.1} parent=0
    _
  %s5 = ssub.s32 1, %s3
  %s6 = scalar_select 0, %s5, %s3
  $region1: #{tpu_custom_call.1} parent=0
    #allocation2 [shape = 'u8[32768]{0}', space=vmem, size = 0x8000, scoped, tag = 'input window, operand 0']
    #allocation3 [shape = 's32[2]{0}', space=sflag, size = 0x8, scoped, tag = 'scoped memory for tpu_custom_call.1']
    #allocation4 [shape = 's32[2]{0}', space=sflag, size = 0x8, scoped, tag = 'scoped memory for tpu_custom_call.1']
    #allocation5 [shape = 'u8[16384]{0}', space=vmem, size = 0x4000, scoped, tag = 'input window, operand 1']
    #allocation6 [shape = 'u8[32768]{0}', space=vmem, size = 0x8000, scoped, tag = 'output window, operand 0']
    %7 = vsyncpa [#allocation3], 0
    %s8 = scalar_lea.sflag [#allocation3], 1
    %9 = vsyncpa %s8, 0
    %10 = vsyncpa [#allocation4], 0
    %s11 = scalar_lea.sflag [#allocation4], 1
    %12 = vsyncpa %s11, 0
    loop: start=0, step=1, limit=4
    $region2: #{tpu_custom_call.1} parent=1 // loop_pre_header
      _
    $region3: #{tpu_custom_call.1} parent=1 // loop_header
      %s14 = sphi 0, %s18
      %p15 = scmp.ge.s32.totalorder %s14, 4
      %s24 = sphi 0, %s26
      %s27 = sphi 0, %s24
      %s28 = sphi 0, %s27
      %s44 = sphi 0, %s28
      %s50 = sphi 0, %s52
      %s53 = sphi 0, %s50
      %s54 = sphi 0, %s53
      %s70 = sphi 0, %s54
      %s76 = sphi 0, %s78
      %s79 = sphi 0, %s76
      %s80 = sphi 0, %s79
      %s96 = sphi 0, %s80
    $region4: #{tpu_custom_call.1} parent=1 // loop_header_branch
      %17 = sbr.rel (%p15) target = $region8
    $region5: #{tpu_custom_call.1} parent=1 // loop_body
      %s19 = ssub.s32 %s14, 1
      %s20 = ssub.s32 %s14, 2
      %s21 = sadd.s32 %s14, 1
      %s22 = ssub.s32 %s14, %s21
      %p23 = scmp.eq.s32.totalorder %s22, 0
      %s25 = sadd.s32 %s24, 1
      %s26 = scalar_select %p23, %s24, %s25
      %p29 = pneg %p23
      %p30 = scmp.eq.s32.totalorder %s14, 1
      %p31 = por %p29, %p30
      %p32 = scmp.ne.s32.totalorder %s24, %s27
      %p33 = scmp.eq.s32.totalorder %s14, 0
      %p34 = por %p32, %p33
      %p35 = scmp.ne.s32.totalorder %s24, %s27
      %p36 = scmp.eq.s32.totalorder %s19, 1
      %p37 = por %p35, %p36
      %p38 = scmp.ne.s32.totalorder %s27, %s28
      %p39 = scmp.eq.s32.totalorder %s19, 0
      %p40 = por %p38, %p39
      %p41 = scmp.ne.s32.totalorder %s27, %s28
      %p42 = scmp.eq.s32.totalorder %s20, 1
      %p43 = por %p41, %p42
      %p45 = scmp.ne.s32.totalorder %s28, %s44
      %p46 = scmp.eq.s32.totalorder %s20, 0
      %p47 = por %p45, %p46
      %s48 = ssub.s32 %s14, %s21
      %p49 = scmp.eq.s32.totalorder %s48, 0
      %s51 = sadd.s32 %s50, 1
      %s52 = scalar_select %p49, %s50, %s51
      %p55 = pneg %p49
      %p56 = scmp.eq.s32.totalorder %s14, 1
      %p57 = por %p55, %p56
      %p58 = scmp.ne.s32.totalorder %s50, %s53
      %p59 = scmp.eq.s32.totalorder %s14, 0
      %p60 = por %p58, %p59
      %p61 = scmp.ne.s32.totalorder %s50, %s53
      %p62 = scmp.eq.s32.totalorder %s19, 1
      %p63 = por %p61, %p62
      %p64 = scmp.ne.s32.totalorder %s53, %s54
      %p65 = scmp.eq.s32.totalorder %s19, 0
      %p66 = por %p64, %p65
      %p67 = scmp.ne.s32.totalorder %s53, %s54
      %p68 = scmp.eq.s32.totalorder %s20, 1
      %p69 = por %p67, %p68
      %p71 = scmp.ne.s32.totalorder %s54, %s70
      %p72 = scmp.eq.s32.totalorder %s20, 0
      %p73 = por %p71, %p72
      %s74 = ssub.s32 %s14, %s21
      %p75 = scmp.eq.s32.totalorder %s74, 0
      %s77 = sadd.s32 %s76, 1
      %s78 = scalar_select %p75, %s76, %s77
      %p81 = pneg %p75
      %p82 = scmp.eq.s32.totalorder %s14, 1
      %p83 = por %p81, %p82
      %p84 = scmp.ne.s32.totalorder %s76, %s79
      %p85 = scmp.eq.s32.totalorder %s14, 0
      %p86 = por %p84, %p85
      %p87 = scmp.ne.s32.totalorder %s76, %s79
      %p88 = scmp.eq.s32.totalorder %s19, 1
      %p89 = por %p87, %p88
      %p90 = scmp.ne.s32.totalorder %s79, %s80
      %p91 = scmp.eq.s32.totalorder %s19, 0
      %p92 = por %p90, %p91
      %p93 = scmp.ne.s32.totalorder %s79, %s80
      %p94 = scmp.eq.s32.totalorder %s20, 1
      %p95 = por %p93, %p94
      %p97 = scmp.ne.s32.totalorder %s80, %s96
      %p98 = scmp.eq.s32.totalorder %s20, 0
      %p99 = por %p97, %p98
      %p100 = scmp.le.s32.totalorder 1, %s14
      %p101 = scmp.lt.s32.totalorder %s14, 3
      %p102 = pnand %p100, %p101
      %p103 = pneg %p102
      // Predicated region
      $region9: #{tpu_custom_call.1} parent=5 // pred_check
        _
      $region10: #{tpu_custom_call.1} parent=5 // pred_check_branch
        %105 = sbr.rel (%p102) target = $region12
      $region11: #{tpu_custom_call.1} parent=5 // pred_region
        %s106 = ssub.s32 %s14, 1
      $region12: #{tpu_custom_call.1} parent=5 // pred_fallthru
        _
      %p107 = scmp.lt.s32.totalorder %s14, 2
      // Predicated region
      $region13: #{tpu_custom_call.1} parent=5 // pred_check
        %p108 = pneg %p107
      $region14: #{tpu_custom_call.1} parent=5 // pred_check_branch
        %110 = sbr.rel (%p108) target = $region16
      $region15: #{tpu_custom_call.1} parent=5 // pred_region
        // Predicated region
        $region17: #{tpu_custom_call.1} parent=15 // pred_check
          %p111 = pneg %p34
        $region18: #{tpu_custom_call.1} parent=15 // pred_check_branch
          %113 = sbr.rel (%p111) target = $region20
        $region19: #{tpu_custom_call.1} parent=15 // pred_region
          %s114 = sand.u32 %s24, 1
          %s115 = scalar_lea.sflag [#allocation3], %s114
          %s116 = sand.u32 %s24, 1
          %s117 = smul.addr %s116, 32
          %s118 = scalar_lea.vmem [#allocation2], %s117
          %s120 = ssub.s32 512, 512
          %121 = vsyncadd %s115, %s120
          %s122 = smul.addr %s14, 2
          %s123 = smul.addr %s122, 128
          %s124 = scalar_lea.hbm %s0, %s123
          %s125 = sshll.u32 %s118, 4
          %s126 = int_to_ptr.vmem [resolvable:$true] %s125
          %131 = dma.hbm_to_vmem [thread:$0]  %s124, 512, %s126, %s115, 512, 256, 16
        $region20: #{tpu_custom_call.1} parent=15 // pred_fallthru
          _
        // Predicated region
        $region21: #{tpu_custom_call.1} parent=15 // pred_check
          %p132 = pneg %p60
        $region22: #{tpu_custom_call.1} parent=15 // pred_check_branch
          %134 = sbr.rel (%p132) target = $region24
        $region23: #{tpu_custom_call.1} parent=15 // pred_region
          %s135 = sand.u32 %s50, 1
          %s136 = sand.u32 %s50, 1
          %s137 = smul.addr %s136, 16
          %s138 = scalar_lea.vmem [#allocation5], %s137
          %s139 = smul.addr %s14, 8
          %s140 = scalar_lea.vmem %s1, %s139
          // Predicated region
          $region25: #{tpu_custom_call.1} parent=23 // pred_check
            _
          $region26: #{tpu_custom_call.1} parent=23 // pred_check_branch
            %142 = sbr.rel (0) target = $region28
          $region27: #{tpu_custom_call.1} parent=23 // pred_region
            // Predicated region
            $region29: #{tpu_custom_call.1} parent=27 // pred_check
              _
            $region30: #{tpu_custom_call.1} parent=27 // pred_check_branch
              %144 = sbr.rel (0) target = $region32
            $region31: #{tpu_custom_call.1} parent=27 // pred_region
              // Predicated region
              $region44: #{tpu_custom_call.1} parent=31 // pred_check
                _
              $region45: #{tpu_custom_call.1} parent=31 // pred_check_branch
                %162 = sbr.rel (0) target = $region47
              $region46: #{tpu_custom_call.1} parent=31 // pred_region
                loop: start=0, step=1, limit=1
                $region48: #{tpu_custom_call.1} parent=46 // loop_pre_header
                  _
                $region49: #{tpu_custom_call.1} parent=46 // loop_header
                  %s164 = sphi 0, %s168
                  %p165 = scmp.ge.s32.totalorder %s164, 1
                  %s169 = sphi %s140, %s140
                  %s170 = sphi %s138, %s138
                $region50: #{tpu_custom_call.1} parent=46 // loop_header_branch
                  %167 = sbr.rel (%p165) target = $region54
                $region51: #{tpu_custom_call.1} parent=46 // loop_body
                  %v171 = vld [vmem:[%s169] sm:$0xff]
                  %172 = vst [vmem:[%s170] sm:$0xff] %v171
                  %v173 = vld [vmem:[%s169 + $0x10] sm:$0xff]
                  %174 = vst [vmem:[%s170 + $0x8] sm:$0xff] %v173
                $region52: #{tpu_custom_call.1} parent=46 // loop_footer
                  %s168 = sadd.s32 1, %s164
                $region53: #{tpu_custom_call.1} parent=46 // loop_footer_branch
                  %163 = sbr.rel target = $region49
                $region54: #{tpu_custom_call.1} parent=46 // loop_exit
                  _
              $region47: #{tpu_custom_call.1} parent=31 // pred_fallthru
                _
              // Predicated region
              $region55: #{tpu_custom_call.1} parent=31 // pred_check
                _
              $region56: #{tpu_custom_call.1} parent=31 // pred_check_branch
                %176 = sbr.rel target = $region58
              $region57: #{tpu_custom_call.1} parent=31 // pred_region
                _
              $region58: #{tpu_custom_call.1} parent=31 // pred_fallthru
                _
            $region32: #{tpu_custom_call.1} parent=27 // pred_fallthru
              _
            // Predicated region
            $region33: #{tpu_custom_call.1} parent=27 // pred_check
              _
            $region34: #{tpu_custom_call.1} parent=27 // pred_check_branch
              %146 = sbr.rel target = $region36
            $region35: #{tpu_custom_call.1} parent=27 // pred_region
              %s148 = ssub.s32 256, 1
              loop: start=0, step=1, limit=1
              $region37: #{tpu_custom_call.1} parent=35 // loop_pre_header
                _
              $region38: #{tpu_custom_call.1} parent=35 // loop_header
                %s150 = sphi 0, %s154
                %p151 = scmp.ge.s32.totalorder %s150, 1
                %s155 = sphi %s140, %s140
                %s156 = sphi %s138, %s138
              $region39: #{tpu_custom_call.1} parent=35 // loop_header_branch
                %153 = sbr.rel (%p151) target = $region43
              $region40: #{tpu_custom_call.1} parent=35 // loop_body
                %v157 = vld [vmem:[%s155] sm:%s148]
                %158 = vst [vmem:[%s156] sm:%s148] %v157
                %v159 = vld [vmem:[%s155 + $0x10] sm:%s148]
                %160 = vst [vmem:[%s156 + $0x8] sm:%s148] %v159
              $region41: #{tpu_custom_call.1} parent=35 // loop_footer
                %s154 = sadd.s32 1, %s150
              $region42: #{tpu_custom_call.1} parent=35 // loop_footer_branch
                %149 = sbr.rel target = $region38
              $region43: #{tpu_custom_call.1} parent=35 // loop_exit
                _
            $region36: #{tpu_custom_call.1} parent=27 // pred_fallthru
              _
          $region28: #{tpu_custom_call.1} parent=23 // pred_fallthru
            _
          %177 = vnop
        $region24: #{tpu_custom_call.1} parent=15 // pred_fallthru
          _
      $region16: #{tpu_custom_call.1} parent=5 // pred_fallthru
        _
      %p178 = scmp.le.s32.totalorder 1, %s14
      %p179 = scmp.lt.s32.totalorder %s14, 3
      %p180 = pnand %p178, %p179
      %p181 = pneg %p180
      // Predicated region
      $region59: #{tpu_custom_call.1} parent=5 // pred_check
        _
      $region60: #{tpu_custom_call.1} parent=5 // pred_check_branch
        %183 = sbr.rel (%p180) target = $region62
      $region61: #{tpu_custom_call.1} parent=5 // pred_region
        %s184 = ssub.s32 %s14, 1
        %s185 = sand.u32 %s27, 1
        %s186 = scalar_lea.sflag [#allocation3], %s185
        %s187 = sand.u32 %s27, 1
        %s188 = smul.addr %s187, 32
        %s189 = scalar_lea.vmem [#allocation2], %s188
        // Predicated region
        $region63: #{tpu_custom_call.1} parent=61 // pred_check
          %p190 = pneg %p40
        $region64: #{tpu_custom_call.1} parent=61 // pred_check_branch
          %192 = sbr.rel (%p190) target = $region66
        $region65: #{tpu_custom_call.1} parent=61 // pred_region
          %193 = dma.done %s186, 512
        $region66: #{tpu_custom_call.1} parent=61 // pred_fallthru
          _
        %s194 = sand.u32 %s53, 1
        %s195 = sand.u32 %s53, 1
        %s196 = smul.addr %s195, 16
        %s197 = scalar_lea.vmem [#allocation5], %s196
        // Predicated region
        $region67: #{tpu_custom_call.1} parent=61 // pred_check
          %p198 = pneg %p66
        $region68: #{tpu_custom_call.1} parent=61 // pred_check_branch
          %200 = sbr.rel (%p198) target = $region70
        $region69: #{tpu_custom_call.1} parent=61 // pred_region
          _
        $region70: #{tpu_custom_call.1} parent=61 // pred_fallthru
          _
        %s201 = sand.u32 %s27, 1
        %s202 = scalar_lea.sflag [#allocation3], %s201
        %s203 = sand.u32 %s27, 1
        %s204 = smul.addr %s203, 32
        %s205 = scalar_lea.vmem [#allocation2], %s204
        %p206 = pneg %p40
        %p207 = pneg %p37
        %s208 = sand.u32 %s53, 1
        %s209 = sand.u32 %s53, 1
        %s210 = smul.addr %s209, 16
        %s211 = scalar_lea.vmem [#allocation5], %s210
        %p212 = pneg %p66
        %p213 = pneg %p63
        %p214 = pneg %p92
        %p215 = pneg %p89
        %s216 = sand.u32 %s79, 1
        %s217 = scalar_lea.sflag [#allocation4], %s216
        %s218 = sand.u32 %s79, 1
        %s219 = smul.addr %s218, 32
        %s220 = scalar_lea.vmem [#allocation6], %s219
        %v221 = vld [vmem:[%s197] sm:$0xff]
        %v222 = vld [vmem:[%s197 + $0x8] sm:$0xff]
        %v223 = vld [vmem:[%s189] sm:$0xff]
        %v224 = vld [vmem:[%s189 + $0x8] sm:$0xff]
        %v225 = vld [vmem:[%s189 + $0x10] sm:$0xff]
        %v226 = vld [vmem:[%s189 + $0x18] sm:$0xff]
        %v227 = vadd.f32 %v223, %v224
        %v228 = vadd.f32 %v227, %v225
        %v229 = vadd.f32 %v228, %v226
        %230 = vadd.xlane.f32.xlu0 %v229
        %v231 = vpop.xlane.xlu0 %230
        %v232 = vmul.f32 %v231, 0.001953125
        %v233 = vsub.f32 %v223, %v232
        %v234 = vsub.f32 %v224, %v232
        %v235 = vsub.f32 %v225, %v232
        %v236 = vsub.f32 %v226, %v232
        %v237 = vmul.f32 %v233, %v233
        %v238 = vmul.f32 %v234, %v234
        %v239 = vmul.f32 %v235, %v235
        %v240 = vmul.f32 %v236, %v236
        %v241 = vadd.f32 %v237, %v238
        %v242 = vadd.f32 %v241, %v239
        %v243 = vadd.f32 %v242, %v240
        %244 = vadd.xlane.f32.xlu0 %v243
        %v245 = vpop.xlane.xlu0 %244
        %v246 = vmul.f32 %v245, 0.001953125
        %v247 = vadd.f32 %v246, 1e-05
        %v248 = vrsqrt.pop %v247
        %v249 = vmul.f32 %v221, %v248
        %v250 = vmul.f32 %v222, %v248
        %v251 = vmul.f32 %v232, %v249
        %v252 = vmul.f32 %v232, %v250
        %255 = vrot.lane.b32.xlu0 %v251, 1
        %v256 = vpop.permute.xlu0 %255
        %257 = vrot.lane.b32.xlu0 %v252, 1
        %v258 = vpop.permute.xlu0 %257
        %v261 = vsub.f32 %v221, %v256
        %v262 = vsub.f32 %v222, %v258
        %264 = vset.pattern.permute.xlu0 0
        %265 = vperm.xlu0 %264, %v249
        %v266 = vpop.permute.xlu0 %265
        %269 = vset.pattern.permute.xlu0 0
        %270 = vperm.xlu0 %269, %v250
        %v271 = vpop.permute.xlu0 %270
        %v273 = vmul.f32 %v223, %v266
        %v274 = vmul.f32 %v224, %v266
        %v275 = vmul.f32 %v225, %v271
        %v276 = vmul.f32 %v226, %v271
        %278 = vset.pattern.permute.xlu0 1
        %279 = vperm.xlu0 %278, %v261
        %v280 = vpop.permute.xlu0 %279
        %283 = vset.pattern.permute.xlu0 1
        %284 = vperm.xlu0 %283, %v262
        %v285 = vpop.permute.xlu0 %284
        %v287 = vadd.f32 %v273, %v280
        %v288 = vadd.f32 %v274, %v280
        %v289 = vadd.f32 %v275, %v285
        %v290 = vadd.f32 %v276, %v285
        %291 = vst [vmem:[%s220] sm:$0xff] %v287
        %292 = vst [vmem:[%s220 + $0x8] sm:$0xff] %v288
        %293 = vst [vmem:[%s220 + $0x10] sm:$0xff] %v289
        %294 = vst [vmem:[%s220 + $0x18] sm:$0xff] %v290
        %s295 = sand.u32 %s79, 1
        %s296 = scalar_lea.sflag [#allocation4], %s295
        %s297 = sand.u32 %s79, 1
        %s298 = smul.addr %s297, 32
        %s299 = scalar_lea.vmem [#allocation6], %s298
        // Predicated region
        $region71: #{tpu_custom_call.1} parent=61 // pred_check
          %p300 = pneg %p89
        $region72: #{tpu_custom_call.1} parent=61 // pred_check_branch
          %302 = sbr.rel (%p300) target = $region74
        $region73: #{tpu_custom_call.1} parent=61 // pred_region
          %s304 = ssub.s32 512, 512
          %305 = vsyncadd %s296, %s304
          %s306 = smul.addr %s19, 2
          %s307 = smul.addr %s306, 128
          %s308 = scalar_lea.hbm %s2, %s307
          %s309 = sshll.u32 %s299, 4
          %s310 = int_to_ptr.vmem [resolvable:$true] %s309
          %315 = dma.vmem_to_hbm [thread:$0]  %s310, 512, %s308, %s296, 256, 512, 16
        $region74: #{tpu_custom_call.1} parent=61 // pred_fallthru
          _
      $region62: #{tpu_custom_call.1} parent=5 // pred_fallthru
        _
      %p316 = scmp.le.s32.totalorder 2, %s14
      // Predicated region
      $region75: #{tpu_custom_call.1} parent=5 // pred_check
        %p317 = pneg %p316
      $region76: #{tpu_custom_call.1} parent=5 // pred_check_branch
        %319 = sbr.rel (%p317) target = $region78
      $region77: #{tpu_custom_call.1} parent=5 // pred_region
        %s320 = ssub.s32 %s14, 2
        // Predicated region
        $region79: #{tpu_custom_call.1} parent=77 // pred_check
          %p321 = pneg %p95
        $region80: #{tpu_custom_call.1} parent=77 // pred_check_branch
          %323 = sbr.rel (%p321) target = $region82
        $region81: #{tpu_custom_call.1} parent=77 // pred_region
          %s324 = sand.u32 %s80, 1
          %s325 = scalar_lea.sflag [#allocation4], %s324
          %s326 = sand.u32 %s80, 1
          %s327 = smul.addr %s326, 32
          %s328 = scalar_lea.vmem [#allocation6], %s327
          %329 = dma.done %s325, 512
        $region82: #{tpu_custom_call.1} parent=77 // pred_fallthru
          _
      $region78: #{tpu_custom_call.1} parent=5 // pred_fallthru
        _
    $region6: #{tpu_custom_call.1} parent=1 // loop_footer
      %s18 = sadd.s32 1, %s14
    $region7: #{tpu_custom_call.1} parent=1 // loop_footer_branch
      %13 = sbr.rel target = $region3
    $region8: #{tpu_custom_call.1} parent=1 // loop_exit
      _
    %330 = vsyncpa [#allocation3], 1
    %s331 = scalar_lea.sflag [#allocation3], 1
    %332 = vsyncpa %s331, 1
    %333 = vsyncpa [#allocation4], 1
    %s334 = scalar_lea.sflag [#allocation4], 1
    %335 = vsyncpa %s334, 1

</llo_original>
